<compile_context>
chip_gen: v5e
topology: v5e:2x2
jax: 0.10.0
libtpu: 0.0.40
codegen_flags: <defaults>
</compile_context>

<pallas_src>
import functools

import jax
import jax.numpy as jnp
from jax import lax
from jax.experimental import pallas as pl
from jax.experimental.pallas import tpu as pltpu

NUM_CLASSES = 4
_EPS = 1e-30  # clamp for log() so padded / all-masked lanes stay finite


def _round_up(x, m):
    return (x + m - 1) // m * m


def _mml_loss_kernel(x_ref, tgt_ref, msk_ref, out_ref, *, batch, block_b):
    """One grid step processes `block_b` examples laid out along the lane axis.

    x_ref   : (4, block_b)  f32  logits  (class on sublanes, example on lanes)
    tgt_ref : (A, block_b)  i32  candidate-answer class ids
    msk_ref : (A, block_b)  f32  per-candidate answer mask / weight
    out_ref : (1, 1)        f32  running -log-likelihood sum (SMEM, resident)
    """
    j = pl.program_id(0)

    @pl.when(j == 0)
    def _():
        out_ref[0, 0] = jnp.float32(0.0)

    x = x_ref[...].astype(jnp.float32)                      # (4, TB)
    tgt = tgt_ref[...]                                      # (A, TB) int32
    msk = msk_ref[...].astype(jnp.float32)                  # (A, TB)

    # Stable softmax, folded: mml = log(sum_c e_c) - log(sum_c e_c * t_c).
    # Class max / sum as unrolled sublane-row ops (no divide, no lane reduce).
    rows = [x[c:c + 1, :] for c in range(NUM_CLASSES)]      # 4 x (1, TB)
    m = jnp.maximum(jnp.maximum(rows[0], rows[1]),
                    jnp.maximum(rows[2], rows[3]))          # (1, TB)
    es = [jnp.exp(r - m) for r in rows]                     # 4 x (1, TB)
    denom = (es[0] + es[1]) + (es[2] + es[3])               # (1, TB)

    # numerator = sum_c e_c * t_c,   t_c = sum_a mask[a] * [target[a] == c]
    numer = jnp.zeros_like(denom)
    for c in range(NUM_CLASSES):                            # static 4-way unroll
        w_c = jnp.sum(msk * (tgt == c).astype(jnp.float32),
                      axis=0, keepdims=True)                # (1, TB)
        numer = numer + es[c] * w_c

    # Per-example -log-likelihood; clamp keeps padded / all-masked lanes finite.
    mml = jnp.log(denom) - jnp.log(jnp.maximum(numer, _EPS))  # (1, TB)

    # Mask out padded lanes of the last (partial) tile before accumulating.
    lane = lax.broadcasted_iota(jnp.int32, mml.shape, 1)
    valid = ((j * block_b + lane) < batch).astype(jnp.float32)
    out_ref[0, 0] += jnp.sum(mml * valid)

    @pl.when(j == pl.num_programs(0) - 1)
    def _():
        out_ref[0, 0] = out_ref[0, 0] * (1.0 / batch)       # mean over real rows


def mml_loss(inp, target, answer_mask, *, block_b=1024):
    """inp: (B, 4) f32 logits, target: (B, A) int, answer_mask: (B, A) f32 -> scalar."""
    B, C = inp.shape
    assert C == NUM_CLASSES, f"expected {NUM_CLASSES} classes, got {C}"
    A = target.shape[1]

    tb = min(block_b, _round_up(B, 128))      # lane tile (multiple of 128)
    b_pad = _round_up(B, tb)
    pad = b_pad - B
    grid = (b_pad // tb,)

    # Layout plumbing: make the batch dimension the (128-wide) lane axis.
    x_t = jnp.pad(inp.astype(jnp.float32).T, ((0, 0), (0, pad)))          # (4, Bp)
    tgt_t = jnp.pad(target.astype(jnp.int32).T, ((0, 0), (0, pad)))       # (A, Bp)
    msk_t = jnp.pad(answer_mask.astype(jnp.float32).T, ((0, 0), (0, pad)))  # (A, Bp)

    kernel = functools.partial(_mml_loss_kernel, batch=B, block_b=tb)
    out = pl.pallas_call(
        kernel,
        out_shape=jax.ShapeDtypeStruct((1, 1), jnp.float32),
        grid=grid,
        in_specs=[
            pl.BlockSpec((NUM_CLASSES, tb), lambda j: (0, j)),   # logits
            pl.BlockSpec((A, tb), lambda j: (0, j)),             # target ids
            pl.BlockSpec((A, tb), lambda j: (0, j)),             # answer mask
        ],
        out_specs=pl.BlockSpec((1, 1), lambda j: (0, 0),
                               memory_space=pltpu.MemorySpace.SMEM),
        compiler_params=pltpu.CompilerParams(
            dimension_semantics=("arbitrary",),       # output accumulates across grid
            vmem_limit_bytes=32 * 1024 * 1024,        # tiny tiles; headroom on v7x
        ),
    )(x_t, tgt_t, msk_t)
    return out[0, 0]


def mml_loss_ref(inp, target, answer_mask):
    """Pure-JAX reference mirroring the PyTorch forward."""
    prob = jax.nn.softmax(inp, axis=1)
    one_hot = jax.nn.one_hot(target, NUM_CLASSES, dtype=jnp.float32)   # (B, A, 4)
    tgt = jnp.sum(one_hot * answer_mask[..., None], axis=1)            # (B, 4)
    mml = -jnp.log(jnp.sum(prob * tgt, axis=1))
    return jnp.mean(mml)


if __name__ == "__main__":
    def make_inputs(key, B, A):
        k1, k2, k3 = jax.random.split(key, 3)
        logits = jax.random.normal(k1, (B, NUM_CLASSES), dtype=jnp.float32)
        target = jax.random.randint(k2, (B, A), 0, NUM_CLASSES, dtype=jnp.int32)
        mask = (jax.random.uniform(k3, (B, A)) > 0.5).astype(jnp.float32)
        mask = mask.at[:, 0].set(1.0)   # every row has >= 1 valid answer (finite log)
        return logits, target, mask

    # Small shape consistent with the module: 8 questions, 8 candidates, 4 classes.
    logits, target, mask = make_inputs(jax.random.PRNGKey(0), 8, 8)
    loss = jax.block_until_ready(mml_loss(logits, target, mask))
    ref = mml_loss_ref(logits, target, mask)
    assert jnp.isfinite(loss), "loss is not finite"
    assert jnp.allclose(loss, ref, rtol=1e-5, atol=1e-5), (loss, ref)

    # Multi-block path: batch spans several lane tiles plus a padded remainder.
    logits, target, mask = make_inputs(jax.random.PRNGKey(1), 300, 8)
    loss = jax.block_until_ready(mml_loss(logits, target, mask, block_b=128))
    ref = mml_loss_ref(logits, target, mask)
    assert jnp.isfinite(loss), "loss is not finite"
    assert jnp.allclose(loss, ref, rtol=1e-5, atol=1e-5), (loss, ref)

    print("KERNEL_OK")
</pallas_src>

<mosaic_0001>
module attributes {stable_mosaic.version = 11 : i64} {
  func.func @_mml_loss_kernel(%arg0: i32, %arg1: memref<4x128xf32, #tpu.memory_space<vmem>>, %arg2: memref<8x128xi32, #tpu.memory_space<vmem>>, %arg3: memref<8x128xf32, #tpu.memory_space<vmem>>, %arg4: memref<1x1xf32, #tpu.memory_space<smem>>) attributes {dimension_semantics = [#tpu.dimension_semantics<arbitrary>], iteration_bounds = array<i64: 1>, scalar_prefetch = 0 : i64, scratch_operands = 0 : i64, tpu.core_type = #tpu.core_type<tc>, window_params = [{transform_indices = @transform_0, window_bounds = array<i64: 4, 128>}, {transform_indices = @transform_1, window_bounds = array<i64: 8, 128>}, {transform_indices = @transform_2, window_bounds = array<i64: 8, 128>}, {transform_indices = @transform_3, window_bounds = array<i64: 1, 1>}]} {
    %c0_i32 = arith.constant 0 : i32
    %0 = arith.cmpi eq, %arg0, %c0_i32 : i32
    %1 = arith.extui %0 : i1 to i32
    %c0_i32_0 = arith.constant 0 : i32
    %2 = arith.cmpi ne, %1, %c0_i32_0 : i32
    scf.if %2 {
      %cst_19 = arith.constant 0.000000e+00 : f32
      %c0_20 = arith.constant 0 : index
      %c0_21 = arith.constant 0 : index
      %85 = memref.load %arg4[%c0_20, %c0_21] : memref<1x1xf32, #tpu.memory_space<smem>>
      memref.store %cst_19, %arg4[%c0_20, %c0_21] : memref<1x1xf32, #tpu.memory_space<smem>>
    } else {
    }
    %c0 = arith.constant 0 : index
    %c0_1 = arith.constant 0 : index
    %3 = vector.load %arg1[%c0, %c0_1] : memref<4x128xf32, #tpu.memory_space<vmem>>, vector<4x128xf32>
    %c0_2 = arith.constant 0 : index
    %c0_3 = arith.constant 0 : index
    %4 = vector.load %arg2[%c0_2, %c0_3] : memref<8x128xi32, #tpu.memory_space<vmem>>, vector<8x128xi32>
    %c0_4 = arith.constant 0 : index
    %c0_5 = arith.constant 0 : index
    %5 = vector.load %arg3[%c0_4, %c0_5] : memref<8x128xf32, #tpu.memory_space<vmem>>, vector<8x128xf32>
    %6 = vector.extract_strided_slice %3 {offsets = [0, 0], sizes = [1, 128], strides = [1, 1]} : vector<4x128xf32> to vector<1x128xf32>
    %7 = vector.extract_strided_slice %3 {offsets = [1, 0], sizes = [1, 128], strides = [1, 1]} : vector<4x128xf32> to vector<1x128xf32>
    %8 = vector.extract_strided_slice %3 {offsets = [2, 0], sizes = [1, 128], strides = [1, 1]} : vector<4x128xf32> to vector<1x128xf32>
    %9 = vector.extract_strided_slice %3 {offsets = [3, 0], sizes = [1, 128], strides = [1, 1]} : vector<4x128xf32> to vector<1x128xf32>
    %10 = arith.maximumf %6, %7 : vector<1x128xf32>
    %11 = arith.maximumf %8, %9 : vector<1x128xf32>
    %12 = arith.maximumf %10, %11 : vector<1x128xf32>
    %13 = arith.subf %6, %12 : vector<1x128xf32>
    %14 = math.exp %13 : vector<1x128xf32>
    %15 = arith.subf %7, %12 : vector<1x128xf32>
    %16 = math.exp %15 : vector<1x128xf32>
    %17 = arith.subf %8, %12 : vector<1x128xf32>
    %18 = math.exp %17 : vector<1x128xf32>
    %19 = arith.subf %9, %12 : vector<1x128xf32>
    %20 = math.exp %19 : vector<1x128xf32>
    %21 = arith.addf %14, %16 : vector<1x128xf32>
    %22 = arith.addf %18, %20 : vector<1x128xf32>
    %23 = arith.addf %21, %22 : vector<1x128xf32>
    %cst = arith.constant 0.000000e+00 : f32
    %24 = vector.broadcast %cst : f32 to vector<1x128xf32>
    %c0_i32_6 = arith.constant 0 : i32
    %25 = vector.broadcast %c0_i32_6 : i32 to vector<8x128xi32>
    %26 = arith.cmpi eq, %4, %25 : vector<8x128xi32>
    %27 = arith.extui %26 : vector<8x128xi1> to vector<8x128xi32>
    %28 = arith.sitofp %27 : vector<8x128xi32> to vector<8x128xf32>
    %29 = arith.mulf %5, %28 : vector<8x128xf32>
    %cst_7 = arith.constant dense<0.000000e+00> : vector<128xf32>
    %30 = vector.multi_reduction <add>, %29, %cst_7 [0] : vector<8x128xf32> to vector<128xf32>
    %31 = vector.shape_cast %30 : vector<128xf32> to vector<1x128xf32>
    %32 = arith.mulf %14, %31 : vector<1x128xf32>
    %33 = arith.addf %24, %32 : vector<1x128xf32>
    %c1_i32 = arith.constant 1 : i32
    %34 = vector.broadcast %c1_i32 : i32 to vector<8x128xi32>
    %35 = arith.cmpi eq, %4, %34 : vector<8x128xi32>
    %36 = arith.extui %35 : vector<8x128xi1> to vector<8x128xi32>
    %37 = arith.sitofp %36 : vector<8x128xi32> to vector<8x128xf32>
    %38 = arith.mulf %5, %37 : vector<8x128xf32>
    %cst_8 = arith.constant dense<0.000000e+00> : vector<128xf32>
    %39 = vector.multi_reduction <add>, %38, %cst_8 [0] : vector<8x128xf32> to vector<128xf32>
    %40 = vector.shape_cast %39 : vector<128xf32> to vector<1x128xf32>
    %41 = arith.mulf %16, %40 : vector<1x128xf32>
    %42 = arith.addf %33, %41 : vector<1x128xf32>
    %c2_i32 = arith.constant 2 : i32
    %43 = vector.broadcast %c2_i32 : i32 to vector<8x128xi32>
    %44 = arith.cmpi eq, %4, %43 : vector<8x128xi32>
    %45 = arith.extui %44 : vector<8x128xi1> to vector<8x128xi32>
    %46 = arith.sitofp %45 : vector<8x128xi32> to vector<8x128xf32>
    %47 = arith.mulf %5, %46 : vector<8x128xf32>
    %cst_9 = arith.constant dense<0.000000e+00> : vector<128xf32>
    %48 = vector.multi_reduction <add>, %47, %cst_9 [0] : vector<8x128xf32> to vector<128xf32>
    %49 = vector.shape_cast %48 : vector<128xf32> to vector<1x128xf32>
    %50 = arith.mulf %18, %49 : vector<1x128xf32>
    %51 = arith.addf %42, %50 : vector<1x128xf32>
    %c3_i32 = arith.constant 3 : i32
    %52 = vector.broadcast %c3_i32 : i32 to vector<8x128xi32>
    %53 = arith.cmpi eq, %4, %52 : vector<8x128xi32>
    %54 = arith.extui %53 : vector<8x128xi1> to vector<8x128xi32>
    %55 = arith.sitofp %54 : vector<8x128xi32> to vector<8x128xf32>
    %56 = arith.mulf %5, %55 : vector<8x128xf32>
    %cst_10 = arith.constant dense<0.000000e+00> : vector<128xf32>
    %57 = vector.multi_reduction <add>, %56, %cst_10 [0] : vector<8x128xf32> to vector<128xf32>
    %58 = vector.shape_cast %57 : vector<128xf32> to vector<1x128xf32>
    %59 = arith.mulf %20, %58 : vector<1x128xf32>
    %60 = arith.addf %51, %59 : vector<1x128xf32>
    %61 = math.log %23 : vector<1x128xf32>
    %cst_11 = arith.constant 1.000000e-30 : f32
    %62 = vector.broadcast %cst_11 : f32 to vector<1x128xf32>
    %63 = arith.maximumf %60, %62 : vector<1x128xf32>
    %64 = math.log %63 : vector<1x128xf32>
    %65 = arith.subf %61, %64 : vector<1x128xf32>
    %66 = tpu.iota {dimensions = array<i32: 1>} : vector<1x128xi32>
    %c128_i32 = arith.constant 128 : i32
    %67 = arith.muli %arg0, %c128_i32 : i32
    %68 = vector.broadcast %67 : i32 to vector<1x128xi32>
    %69 = arith.addi %68, %66 : vector<1x128xi32>
    %c8_i32 = arith.constant 8 : i32
    %70 = vector.broadcast %c8_i32 : i32 to vector<1x128xi32>
    %71 = arith.cmpi slt, %69, %70 : vector<1x128xi32>
    %72 = arith.extui %71 : vector<1x128xi1> to vector<1x128xi32>
    %73 = arith.sitofp %72 : vector<1x128xi32> to vector<1x128xf32>
    %c0_12 = arith.constant 0 : index
    %c0_13 = arith.constant 0 : index
    %74 = memref.load %arg4[%c0_12, %c0_13] : memref<1x1xf32, #tpu.memory_space<smem>>
    %75 = arith.mulf %65, %73 : vector<1x128xf32>
    %76 = vector.shape_cast %75 : vector<1x128xf32> to vector<1x1x128xf32>
    %cst_14 = arith.constant dense<0.000000e+00> : vector<1xf32>
    %77 = vector.multi_reduction <add>, %76, %cst_14 [1, 2] : vector<1x1x128xf32> to vector<1xf32>
    %78 = vector.shape_cast %77 : vector<1xf32> to vector<1x1x1xf32>
    %79 = vector.extract %78[0, 0, 0] : f32 from vector<1x1x1xf32>
    %80 = arith.addf %74, %79 : f32
    %c0_15 = arith.constant 0 : index
    %c0_16 = arith.constant 0 : index
    %81 = memref.load %arg4[%c0_15, %c0_16] : memref<1x1xf32, #tpu.memory_space<smem>>
    memref.store %80, %arg4[%c0_15, %c0_16] : memref<1x1xf32, #tpu.memory_space<smem>>
    %c0_i32_17 = arith.constant 0 : i32
    %82 = arith.cmpi eq, %arg0, %c0_i32_17 : i32
    %83 = arith.extui %82 : i1 to i32
    %c0_i32_18 = arith.constant 0 : i32
    %84 = arith.cmpi ne, %83, %c0_i32_18 : i32
    scf.if %84 {
      %c0_19 = arith.constant 0 : index
      %c0_20 = arith.constant 0 : index
      %85 = memref.load %arg4[%c0_19, %c0_20] : memref<1x1xf32, #tpu.memory_space<smem>>
      %cst_21 = arith.constant 1.250000e-01 : f32
      %86 = arith.mulf %85, %cst_21 : f32
      %c0_22 = arith.constant 0 : index
      %c0_23 = arith.constant 0 : index
      %87 = memref.load %arg4[%c0_22, %c0_23] : memref<1x1xf32, #tpu.memory_space<smem>>
      memref.store %86, %arg4[%c0_22, %c0_23] : memref<1x1xf32, #tpu.memory_space<smem>>
    } else {
    }
    return
  }
  func.func @transform_0(%arg0: i32) -> (i32, i32) {
    %c0_i32 = arith.constant 0 : i32
    %c0_i32_0 = arith.constant 0 : i32
    return %c0_i32, %arg0 : i32, i32
  }
  func.func @transform_1(%arg0: i32) -> (i32, i32) {
    %c0_i32 = arith.constant 0 : i32
    %c0_i32_0 = arith.constant 0 : i32
    return %c0_i32, %arg0 : i32, i32
  }
  func.func @transform_2(%arg0: i32) -> (i32, i32) {
    %c0_i32 = arith.constant 0 : i32
    %c0_i32_0 = arith.constant 0 : i32
    return %c0_i32, %arg0 : i32, i32
  }
  func.func @transform_3(%arg0: i32) -> (i32, i32) {
    %c0_i32 = arith.constant 0 : i32
    %c0_i32_0 = arith.constant 0 : i32
    %c0_i32_1 = arith.constant 0 : i32
    return %c0_i32, %c0_i32_0 : i32, i32
  }
}

</mosaic_0001>

<llo_original>
// kernel: tpu_custom_call.1
$region0: #{tpu_custom_call.1}
  #allocation0 [shape = 'u32[]', space=smem, size = 0x4, offset = 0x4, fixed_abs, tag = 'smem constant byte address 0x4 - core index']
  #allocation1 [shape = 'u32[72,128]{1,0:T(1,128)}', space=vmem, size = 0x9000, scoped, tag = 'internal scratch']
  %s0 = inlined_call_operand.hbm [shape: f32[4,128], index: 0, kind: input, shape index: {}]
  %s1 = inlined_call_operand.hbm [shape: s32[8,128], index: 1, kind: input, shape index: {}]
  %s2 = inlined_call_operand.hbm [shape: f32[8,128], index: 2, kind: input, shape index: {}]
  %s3 = inlined_call_operand.hbm [shape: f32[1,1], index: 3, kind: output, shape index: {}]
  %s4 = sld [smem:[#allocation0]]
  $region42: #{tpu_custom_call.1} parent=0
    _
  %s6 = ssub.s32 1, %s4
  %s7 = scalar_select 0, %s6, %s4
  $region1: #{tpu_custom_call.1} parent=0
    #allocation2 [shape = 'u8[2048]{0}', space=vmem, size = 0x800, scoped, tag = 'input window, operand 0, single buffered']
    #allocation3 [shape = 's32[1]{0}', space=sflag, size = 0x4, scoped, tag = 'scoped memory for tpu_custom_call.1']
    #allocation4 [shape = 's32[1]{0}', space=sflag, size = 0x4, scoped, tag = 'scoped memory for tpu_custom_call.1']
    #allocation5 [shape = 'u8[4096]{0}', space=vmem, size = 0x1000, scoped, tag = 'input window, operand 1, single buffered']
    #allocation6 [shape = 's32[1]{0}', space=sflag, size = 0x4, scoped, tag = 'scoped memory for tpu_custom_call.1']
    #allocation7 [shape = 'u8[4096]{0}', space=vmem, size = 0x1000, scoped, tag = 'input window, operand 2, single buffered']
    #allocation8 [shape = 'u8[512]{0}', space=smem, size = 0x200, scoped, tag = 'output window, operand 0, single buffered']
    %8 = vsyncpa [#allocation3], 0
    %9 = vsyncpa [#allocation6], 0
    %10 = vsyncpa [#allocation4], 0
    // Predicated region
    $region2: #{tpu_custom_call.1} parent=1 // pred_check
      _
    $region3: #{tpu_custom_call.1} parent=1 // pred_check_branch
      %12 = sbr.rel (0) target = $region5
    $region4: #{tpu_custom_call.1} parent=1 // pred_region
      %14 = vsyncadd [#allocation3], 0
      %s16 = sshll.u32 %s0, 4
      %s17 = int_to_ptr.hbm [resolvable:$true] %s16
      %s18 = sshll.u32 [#allocation2], 4
      %s19 = int_to_ptr.vmem [resolvable:$true] %s18
      %21 = dma.hbm_to_vmem [thread:$0]  %s17, 64, %s19, [#allocation3]
    $region5: #{tpu_custom_call.1} parent=1 // pred_fallthru
      _
    // Predicated region
    $region6: #{tpu_custom_call.1} parent=1 // pred_check
      _
    $region7: #{tpu_custom_call.1} parent=1 // pred_check_branch
      %23 = sbr.rel (0) target = $region9
    $region8: #{tpu_custom_call.1} parent=1 // pred_region
      %25 = vsyncadd [#allocation6], 0
      %s27 = sshll.u32 %s1, 4
      %s28 = int_to_ptr.hbm [resolvable:$true] %s27
      %s29 = sshll.u32 [#allocation5], 4
      %s30 = int_to_ptr.vmem [resolvable:$true] %s29
      %32 = dma.hbm_to_vmem [thread:$0]  %s28, 128, %s30, [#allocation6]
    $region9: #{tpu_custom_call.1} parent=1 // pred_fallthru
      _
    // Predicated region
    $region10: #{tpu_custom_call.1} parent=1 // pred_check
      _
    $region11: #{tpu_custom_call.1} parent=1 // pred_check_branch
      %34 = sbr.rel (0) target = $region13
    $region12: #{tpu_custom_call.1} parent=1 // pred_region
      %36 = vsyncadd [#allocation6], 0
      %s38 = sshll.u32 %s2, 4
      %s39 = int_to_ptr.hbm [resolvable:$true] %s38
      %s40 = sshll.u32 [#allocation7], 4
      %s41 = int_to_ptr.vmem [resolvable:$true] %s40
      %43 = dma.hbm_to_vmem [thread:$0]  %s39, 128, %s41, [#allocation6]
    $region13: #{tpu_custom_call.1} parent=1 // pred_fallthru
      _
    // Predicated region
    $region14: #{tpu_custom_call.1} parent=1 // pred_check
      _
    $region15: #{tpu_custom_call.1} parent=1 // pred_check_branch
      %45 = sbr.rel (0) target = $region17
    $region16: #{tpu_custom_call.1} parent=1 // pred_region
      %47 = dma.done [#allocation3], 64
    $region17: #{tpu_custom_call.1} parent=1 // pred_fallthru
      _
    // Predicated region
    $region18: #{tpu_custom_call.1} parent=1 // pred_check
      _
    $region19: #{tpu_custom_call.1} parent=1 // pred_check_branch
      %49 = sbr.rel (0) target = $region21
    $region20: #{tpu_custom_call.1} parent=1 // pred_region
      %51 = dma.done [#allocation6], 128
    $region21: #{tpu_custom_call.1} parent=1 // pred_fallthru
      _
    // Predicated region
    $region22: #{tpu_custom_call.1} parent=1 // pred_check
      _
    $region23: #{tpu_custom_call.1} parent=1 // pred_check_branch
      %53 = sbr.rel (0) target = $region25
    $region24: #{tpu_custom_call.1} parent=1 // pred_region
      %55 = dma.done [#allocation6], 128
    $region25: #{tpu_custom_call.1} parent=1 // pred_fallthru
      _
    %p56 = scmp.eq.s32.totalorder 0, 0
    // Predicated region
    $region26: #{tpu_custom_call.1} parent=1 // pred_check
      %p57 = pneg %p56
    $region27: #{tpu_custom_call.1} parent=1 // pred_check_branch
      %59 = sbr.rel (%p57) target = $region29
    $region28: #{tpu_custom_call.1} parent=1 // pred_region
      %s60 = scalar_lea.smem [#allocation8], 0
      %61 = sst [smem:[%s60]] 0.0
    $region29: #{tpu_custom_call.1} parent=1 // pred_fallthru
      _
    %v62 = vld [vmem:[#allocation2] sm:$0xf]
    %v63 = vld [vmem:[#allocation5] sm:$0xff]
    %v64 = vld [vmem:[#allocation7] sm:$0xff]
    %v66 = vrot.slane %v62, 1
    %v68 = vmax.f32 %v62, %v66
    %v70 = vrot.slane %v68, 2
    %v72 = vmax.f32 %v68, %v70
    %v73 = vsub.f32 %v62, %v72
    %v74 = vmul.f32 %v73, 1.442695
    %v75 = vpow.pop %v74
    %v77 = vrot.slane %v72, 7
    %v79 = vsub.f32 %v62, %v77
    %v80 = vmul.f32 %v79, 1.442695
    %v81 = vpow.pop %v80
    %v82 = vrot.slane %v72, 6
    %v84 = vsub.f32 %v62, %v82
    %v85 = vmul.f32 %v84, 1.442695
    %v86 = vpow.pop %v85
    %v87 = vrot.slane %v72, 5
    %v89 = vsub.f32 %v62, %v87
    %v90 = vmul.f32 %v89, 1.442695
    %v91 = vpow.pop %v90
    %v93 = vrot.slane %v81, 1
    %v95 = vadd.f32 %v75, %v93
    %v97 = vrot.slane %v91, 1
    %v99 = vadd.f32 %v86, %v97
    %v101 = vrot.slane %v99, 2
    %v103 = vadd.f32 %v95, %v101
    %vm104 = vcmp.eq.s32.totalorder %v63, 0
    %v105 = vsel %vm104, 1, 0
    %v106 = vcvt.s32.f32 %v105
    %v107 = vmul.f32 %v64, %v106
    %v108 = vrot.slane %v107, 4
    %v109 = vadd.f32 %v107, %v108
    %v110 = vrot.slane %v109, 2
    %v111 = vadd.f32 %v109, %v110
    %v112 = vrot.slane %v111, 1
    %v113 = vadd.f32 %v111, %v112
    %v114 = vmul.f32 %v75, %v113
    %v115 = vadd.f32 %v114, 0.0
    %vm116 = vcmp.eq.s32.totalorder %v63, 1
    %v117 = vsel %vm116, 1, 0
    %v118 = vcvt.s32.f32 %v117
    %v119 = vmul.f32 %v64, %v118
    %v120 = vrot.slane %v119, 4
    %v121 = vadd.f32 %v119, %v120
    %v122 = vrot.slane %v121, 2
    %v123 = vadd.f32 %v121, %v122
    %v124 = vrot.slane %v123, 1
    %v125 = vadd.f32 %v123, %v124
    %v126 = vmul.f32 %v81, %v125
    %v128 = vrot.slane %v126, 1
    %v130 = vadd.f32 %v115, %v128
    %vm131 = vcmp.eq.s32.totalorder %v63, 2
    %v132 = vsel %vm131, 1, 0
    %v133 = vcvt.s32.f32 %v132
    %v134 = vmul.f32 %v64, %v133
    %v135 = vrot.slane %v134, 4
    %v136 = vadd.f32 %v134, %v135
    %v137 = vrot.slane %v136, 2
    %v138 = vadd.f32 %v136, %v137
    %v139 = vrot.slane %v138, 1
    %v140 = vadd.f32 %v138, %v139
    %v141 = vmul.f32 %v86, %v140
    %v143 = vrot.slane %v141, 2
    %v145 = vadd.f32 %v130, %v143
    %vm146 = vcmp.eq.s32.totalorder %v63, 3
    %v147 = vsel %vm146, 1, 0
    %v148 = vcvt.s32.f32 %v147
    %v149 = vmul.f32 %v64, %v148
    %v150 = vrot.slane %v149, 4
    %v151 = vadd.f32 %v149, %v150
    %v152 = vrot.slane %v151, 2
    %v153 = vadd.f32 %v151, %v152
    %v154 = vrot.slane %v153, 1
    %v155 = vadd.f32 %v153, %v154
    %v156 = vmul.f32 %v91, %v155
    %v158 = vrot.slane %v156, 3
    %v160 = vadd.f32 %v145, %v158
    %v161 = vlog2.pop %v103
    %v162 = vmul.f32 %v161, 0.6931472
    %v163 = vmax.f32 %v160, 1e-30
    %v164 = vlog2.pop %v163
    %v165 = vmul.f32 %v164, 0.6931472
    %v166 = vsub.f32 %v162, %v165
    %v167 = vlaneseq
    %v168 = vand.u32 %v167, 127
    %s169 = smul.u32 0, 128
    %v170 = vstv %s169
    %v171 = vadd.s32 %v170, %v168
    %vm172 = vcmp.lt.s32.totalorder %v171, 8
    %v173 = vsel %vm172, 1, 0
    %v174 = vcvt.s32.f32 %v173
    %s175 = sld [smem:[#allocation8]]
    %v176 = vmul.f32 %v166, %v174
    %vm177 = vcmask 1040384
    %v178 = vsel %vm177, %v176, 0.0
    %179 = vadd.xlane.f32.xlu0 %v178
    %v180 = vpop.xlane.xlu0 %179
    %v181 = vrot.slane %v180, 4
    %v182 = vadd.f32 %v180, %v181
    %v183 = vrot.slane %v182, 2
    %v184 = vadd.f32 %v182, %v183
    %v185 = vrot.slane %v184, 1
    %v186 = vadd.f32 %v184, %v185
    %s187 = vtos %v186
    %s188 = sadd.f32 %s175, %s187
    %s189 = scalar_lea.smem [#allocation8], 0
    %190 = sst [smem:[%s189]] %s188
    // Predicated region
    $region30: #{tpu_custom_call.1} parent=1 // pred_check
      %p191 = pneg %p56
    $region31: #{tpu_custom_call.1} parent=1 // pred_check_branch
      %193 = sbr.rel (%p191) target = $region33
    $region32: #{tpu_custom_call.1} parent=1 // pred_region
      %s194 = sld [smem:[#allocation8]]
      %s195 = smul.f32 %s194, 0.125
      %196 = sst [smem:[%s189]] %s195
    $region33: #{tpu_custom_call.1} parent=1 // pred_fallthru
      _
    // Predicated region
    $region34: #{tpu_custom_call.1} parent=1 // pred_check
      _
    $region35: #{tpu_custom_call.1} parent=1 // pred_check_branch
      %198 = sbr.rel (0) target = $region37
    $region36: #{tpu_custom_call.1} parent=1 // pred_region
      %200 = vsyncadd [#allocation4], 0
      %s202 = sshll.u32 %s3, 4
      %s203 = int_to_ptr.hbm [resolvable:$true] %s202
      %205 = dma.smem_to_hbm [#allocation8], 16, %s203, [#allocation4]
    $region37: #{tpu_custom_call.1} parent=1 // pred_fallthru
      _
    // Predicated region
    $region38: #{tpu_custom_call.1} parent=1 // pred_check
      _
    $region39: #{tpu_custom_call.1} parent=1 // pred_check_branch
      %207 = sbr.rel (0) target = $region41
    $region40: #{tpu_custom_call.1} parent=1 // pred_region
      %209 = dma.done [#allocation4], 16
    $region41: #{tpu_custom_call.1} parent=1 // pred_fallthru
      _
    %210 = sfence
    %211 = vsyncpa [#allocation3], 1
    %212 = vsyncpa [#allocation6], 1
    %213 = vsyncpa [#allocation4], 1

</llo_original>
